<compile_context>
chip_gen: v5e
topology: v5e:2x2
jax: 0.10.0
libtpu: 0.0.40
codegen_flags: <defaults>
</compile_context>

<pallas_src>
import jax
import jax.numpy as jnp
import numpy as np
from jax.experimental import pallas as pl
from jax.experimental.pallas import tpu as pltpu

HIDDEN = 128          # hidden_dim of the module
HEADS = 4             # nn.MultiheadAttention(num_heads=4)
HEAD_DIM = HIDDEN // HEADS
AUDIO_DIM = 13        # audio_feat_dim
NUM_CLASSES = 2
VOCAB = 100
SEQ = 8
BATCH = 2

_F32 = jnp.float32
_WDT = jnp.bfloat16   # weight-DMA / MXU-operand dtype (accumulate stays f32)


def _fusion_kernel(ids_ref,                    # SMEM (B, S) int32 (scalar prefetch)
                   emb_hbm,                    # HBM  (VOCAB, H) f32  (pl.ANY)
                   audio_ref,                  # VMEM (B, A) f32
                   wqkv_ref, bqkv_ref,         # (H, 3H) bf16 / (1, 3H) f32
                   wakv_ref, bakv_ref,         # (A, 2H) bf16 / (1, 2H) f32
                   woc_ref, boc_ref,           # (H, C) bf16  / (1, C) f32
                   hmask_ref, emask_ref,       # (H, HEADS) f32 / (HEADS, H) f32
                   out_ref,                    # VMEM (B, C) f32
                   cls_buf, sem):              # scratch: VMEM (B, H) f32, DMA sems (B,)
    # --- gather the B CLS embedding rows straight from HBM -----------------
    n_rows = cls_buf.shape[0]
    copies = []
    for b in range(n_rows):                    # tiny static trip count (B=2)
        row = ids_ref[b, 0]                    # CLS token id, scalar from SMEM
        cp = pltpu.make_async_copy(emb_hbm.at[pl.ds(row, 1)],
                                   cls_buf.at[pl.ds(b, 1)],
                                   sem.at[b])
        cp.start()
        copies.append(cp)
    for cp in copies:
        cp.wait()

    cls_bf = cls_buf[...].astype(_WDT)         # (B, H)  single-vreg convert
    audio_bf = audio_ref[...].astype(_WDT)     # (B, A)

    # Fused q/k/v projection of the CLS token (bf16 x bf16 -> f32 accumulate;
    # the 1/sqrt(head_dim) softmax scale is pre-folded into wq).
    qkv = jnp.dot(cls_bf, wqkv_ref[...],
                  preferred_element_type=_F32) + bqkv_ref[...]          # (B, 3H)
    q0 = qkv[:, 0 * HIDDEN:1 * HIDDEN]
    k0 = qkv[:, 1 * HIDDEN:2 * HIDDEN]
    v0 = qkv[:, 2 * HIDDEN:3 * HIDDEN]

    # Audio path with audio_proj folded through k/v: one (B,A)x(A,2H) matmul.
    kv1 = jnp.dot(audio_bf, wakv_ref[...],
                  preferred_element_type=_F32) + bakv_ref[...]          # (B, 2H)
    k1 = kv1[:, :HIDDEN]
    v1 = kv1[:, HIDDEN:]

    # Per-head score difference s0 - s1 via a single block-diagonal mask dot
    # (scores are linear in k, so (q*k0)@M - (q*k1)@M == (q*(k0-k1))@M exactly).
    sdiff = jnp.dot(q0 * (k0 - k1), hmask_ref[...],
                    preferred_element_type=_F32)                        # (B, HEADS)

    # 2-key softmax == sigmoid of the score difference.
    # (score magnitudes here are O(1), so exp cannot overflow)
    w0 = pl.reciprocal(1.0 + jnp.exp(-sdiff), approx=True)              # (B, HEADS)

    # Expand per-head weights back to 128 lanes with an indicator matmul.
    # Because emask rows are 0/1 indicators, w1f == 1 - w0f, hence
    # attn = w0f*v0 + w1f*v1 = v1 + w0f*(v0 - v1)  (one expand dot total).
    w0f = jnp.dot(w0, emask_ref[...], preferred_element_type=_F32)      # (B, H)
    attn = v1 + w0f * (v0 - v1)                                         # (B, H)

    # MHA out_proj folded into the classifier.
    out_ref[...] = (jnp.dot(attn.astype(_WDT), woc_ref[...],
                            preferred_element_type=_F32) + boc_ref[...])


def emotion_shift_forward(input_ids, attention_mask, audio_feat, folded):
    # TODO(synk): BertModel.from_pretrained has no clean Pallas equivalent;
    # replaced with a deterministic embedding-table stub producing a
    # hidden_dim-wide CLS embedding (attention_mask is unused here).
    del attention_mask
    B = input_ids.shape[0]

    grid_spec = pltpu.PrefetchScalarGridSpec(
        num_scalar_prefetch=1,                 # input_ids -> SMEM
        grid=(1,),
        in_specs=[
            pl.BlockSpec(memory_space=pl.ANY),                        # embedding (HBM)
            pl.BlockSpec((B, AUDIO_DIM), lambda i, ids: (0, 0)),
            pl.BlockSpec((HIDDEN, 3 * HIDDEN), lambda i, ids: (0, 0)),
            pl.BlockSpec((1, 3 * HIDDEN), lambda i, ids: (0, 0)),
            pl.BlockSpec((AUDIO_DIM, 2 * HIDDEN), lambda i, ids: (0, 0)),
            pl.BlockSpec((1, 2 * HIDDEN), lambda i, ids: (0, 0)),
            pl.BlockSpec((HIDDEN, NUM_CLASSES), lambda i, ids: (0, 0)),
            pl.BlockSpec((1, NUM_CLASSES), lambda i, ids: (0, 0)),
            pl.BlockSpec((HIDDEN, HEADS), lambda i, ids: (0, 0)),
            pl.BlockSpec((HEADS, HIDDEN), lambda i, ids: (0, 0)),
        ],
        out_specs=pl.BlockSpec((B, NUM_CLASSES), lambda i, ids: (0, 0)),
        scratch_shapes=[
            pltpu.VMEM((B, HIDDEN), _F32),        # CLS embedding rows
            pltpu.SemaphoreType.DMA((B,)),        # one DMA sem per row
        ],
    )

    return pl.pallas_call(
        _fusion_kernel,
        grid_spec=grid_spec,
        out_shape=jax.ShapeDtypeStruct((B, NUM_CLASSES), _F32),
        compiler_params=pltpu.CompilerParams(
            dimension_semantics=("arbitrary",)),
    )(
        input_ids,                               # scalar-prefetch operand
        folded["embedding"],
        audio_feat.astype(_F32),
        folded["wqkv"], folded["bqkv"],
        folded["wakv"], folded["bakv"],
        folded["woc"], folded["boc"],
        folded["head_mask"], folded["expand_mask"],
    )


def init_params(key):
    """Raw parameters matching the PyTorch module layout (weights transposed
    to (in_features, out_features))."""
    ks = jax.random.split(key, 14)
    H, A = HIDDEN, AUDIO_DIM

    def w(k, shape, scale):
        return jax.random.normal(k, shape, _F32) * scale

    return {
        # text-encoder stub
        "embedding": w(ks[0], (VOCAB, H), 0.02),
        # nn.Linear(audio_feat_dim, hidden_dim)
        "wa": w(ks[1], (A, H), 1.0 / np.sqrt(A)),
        "ba": w(ks[2], (1, H), 0.02),
        # MultiheadAttention in_proj (split into q/k/v)
        "wq": w(ks[3], (H, H), 1.0 / np.sqrt(H)),
        "wk": w(ks[4], (H, H), 1.0 / np.sqrt(H)),
        "wv": w(ks[5], (H, H), 1.0 / np.sqrt(H)),
        "bq": w(ks[6], (1, H), 0.02),
        "bk": w(ks[7], (1, H), 0.02),
        "bv": w(ks[8], (1, H), 0.02),
        # MultiheadAttention out_proj
        "wo": w(ks[9], (H, H), 1.0 / np.sqrt(H)),
        "bo": w(ks[10], (1, H), 0.02),
        # classifier: nn.Linear(hidden_dim, 2)
        "wc": w(ks[11], (H, NUM_CLASSES), 1.0 / np.sqrt(H)),
        "bc": w(ks[12], (1, NUM_CLASSES), 0.02),
    }


def fold_params(p):
    """Host-side, algebraically-exact weight folding + constant head masks."""
    scale = np.float32(1.0 / np.sqrt(HEAD_DIM))

    # CLS-side fused q/k/v projection; softmax scale folded into q.
    wqkv = jnp.concatenate([p["wq"] * scale, p["wk"], p["wv"]], axis=1)  # (H, 3H)
    bqkv = jnp.concatenate([p["bq"] * scale, p["bk"], p["bv"]], axis=1)  # (1, 3H)

    # Audio path: audio_emb is only consumed by the k/v projections, so fold
    # audio_proj through them.
    wak = p["wa"] @ p["wk"]                    # (A, H)
    wav = p["wa"] @ p["wv"]                    # (A, H)
    bak = p["ba"] @ p["wk"] + p["bk"]          # (1, H)
    bav = p["ba"] @ p["wv"] + p["bv"]          # (1, H)
    wakv = jnp.concatenate([wak, wav], axis=1)  # (A, 2H)
    bakv = jnp.concatenate([bak, bav], axis=1)  # (1, 2H)

    # fused_emb is only consumed by the classifier: fold out_proj into it.
    woc = p["wo"] @ p["wc"]                    # (H, 2)
    boc = p["bo"] @ p["wc"] + p["bc"]          # (1, 2)

    # Block-diagonal head masks (constant): per-head score reduction and
    # per-head weight expansion as tiny matmuls (kept f32, trivially small).
    lane = np.arange(HIDDEN)[:, None]
    head = np.arange(HEADS)[None, :]
    head_mask = (lane // HEAD_DIM == head).astype(np.float32)     # (H, HEADS)
    expand_mask = np.ascontiguousarray(head_mask.T)               # (HEADS, H)

    return {
        "embedding": p["embedding"].astype(_F32),
        "wqkv": wqkv.astype(_WDT), "bqkv": bqkv.astype(_F32),
        "wakv": wakv.astype(_WDT), "bakv": bakv.astype(_F32),
        "woc": woc.astype(_WDT), "boc": boc.astype(_F32),
        "head_mask": jnp.asarray(head_mask, _F32),
        "expand_mask": jnp.asarray(expand_mask, _F32),
    }


def _reference(cls_emb, audio_feat, p):
    """Plain-JAX reference matching torch.nn.MultiheadAttention semantics
    (unfused, f32 weights)."""
    audio_emb = audio_feat @ p["wa"] + p["ba"][0]
    combined = jnp.stack([cls_emb, audio_emb], axis=0)            # (L=2, B, H)
    q = combined @ p["wq"] + p["bq"][0]
    k = combined @ p["wk"] + p["bk"][0]
    v = combined @ p["wv"] + p["bv"][0]
    L, B, H = q.shape
    qh = q.reshape(L, B, HEADS, HEAD_DIM)
    kh = k.reshape(L, B, HEADS, HEAD_DIM)
    vh = v.reshape(L, B, HEADS, HEAD_DIM)
    scores = jnp.einsum("lbhd,mbhd->bhlm", qh, kh) / np.sqrt(HEAD_DIM)
    attn = jax.nn.softmax(scores, axis=-1)
    out = jnp.einsum("bhlm,mbhd->lbhd", attn, vh).reshape(L, B, H)
    fused = out[0] @ p["wo"] + p["bo"][0]
    return fused @ p["wc"] + p["bc"][0]


if __name__ == "__main__":
    key = jax.random.PRNGKey(0)
    k_ids, k_audio, k_params = jax.random.split(key, 3)

    input_ids = jax.random.randint(k_ids, (BATCH, SEQ), 0, VOCAB, dtype=jnp.int32)
    attention_mask = jnp.ones((BATCH, SEQ), dtype=jnp.int32)
    audio_feat = jax.random.normal(k_audio, (BATCH, AUDIO_DIM), _F32)

    params = init_params(k_params)
    folded = fold_params(params)

    logits = emotion_shift_forward(input_ids, attention_mask, audio_feat, folded)
    logits = jax.block_until_ready(logits)
    assert logits.shape == (BATCH, NUM_CLASSES)

    # Correctness check against the unfused pure-JAX reference (f32 weights).
    # Tolerance accounts for bf16 weights/activations + approximate reciprocal.
    cls_emb = jnp.take(params["embedding"], input_ids[:, 0], axis=0)
    ref = _reference(cls_emb, audio_feat, params)
    np.testing.assert_allclose(np.asarray(logits), np.asarray(ref),
                               rtol=3e-2, atol=3e-2)
    print("KERNEL_OK")
</pallas_src>

<mosaic_0001>
module attributes {stable_mosaic.version = 11 : i64} {
  func.func @_fusion_kernel(%arg0: i32, %arg1: memref<2x8xi32, #tpu.memory_space<smem>>, %arg2: memref<100x128xf32, #tpu.memory_space<any>>, %arg3: memref<2x13xf32, #tpu.memory_space<vmem>>, %arg4: memref<128x384xbf16, #tpu.memory_space<vmem>>, %arg5: memref<1x384xf32, #tpu.memory_space<vmem>>, %arg6: memref<13x256xbf16, #tpu.memory_space<vmem>>, %arg7: memref<1x256xf32, #tpu.memory_space<vmem>>, %arg8: memref<128x2xbf16, #tpu.memory_space<vmem>>, %arg9: memref<1x2xf32, #tpu.memory_space<vmem>>, %arg10: memref<128x4xf32, #tpu.memory_space<vmem>>, %arg11: memref<4x128xf32, #tpu.memory_space<vmem>>, %arg12: memref<2x2xf32, #tpu.memory_space<vmem>>, %arg13: memref<2x128xf32, #tpu.memory_space<vmem>>, %arg14: memref<2x!tpu.dma_semaphore, #tpu.memory_space<semaphore_mem>>) attributes {dimension_semantics = [#tpu.dimension_semantics<arbitrary>], iteration_bounds = array<i64: 1>, scalar_prefetch = 1 : i64, scratch_operands = 2 : i64, tpu.core_type = #tpu.core_type<tc>, window_params = [{}, {pipeline_mode = #tpu.pipeline_mode<synchronous>, transform_indices = @transform_1, window_bounds = array<i64: 2, 13>}, {pipeline_mode = #tpu.pipeline_mode<synchronous>, transform_indices = @transform_2, window_bounds = array<i64: 128, 384>}, {pipeline_mode = #tpu.pipeline_mode<synchronous>, transform_indices = @transform_3, window_bounds = array<i64: 1, 384>}, {pipeline_mode = #tpu.pipeline_mode<synchronous>, transform_indices = @transform_4, window_bounds = array<i64: 13, 256>}, {pipeline_mode = #tpu.pipeline_mode<synchronous>, transform_indices = @transform_5, window_bounds = array<i64: 1, 256>}, {pipeline_mode = #tpu.pipeline_mode<synchronous>, transform_indices = @transform_6, window_bounds = array<i64: 128, 2>}, {pipeline_mode = #tpu.pipeline_mode<synchronous>, transform_indices = @transform_7, window_bounds = array<i64: 1, 2>}, {pipeline_mode = #tpu.pipeline_mode<synchronous>, transform_indices = @transform_8, window_bounds = array<i64: 128, 4>}, {pipeline_mode = #tpu.pipeline_mode<synchronous>, transform_indices = @transform_9, window_bounds = array<i64: 4, 128>}, {pipeline_mode = #tpu.pipeline_mode<synchronous>, transform_indices = @transform_10, window_bounds = array<i64: 2, 2>}]} {
    %c0 = arith.constant 0 : index
    %c0_0 = arith.constant 0 : index
    %0 = memref.load %arg1[%c0, %c0_0] : memref<2x8xi32, #tpu.memory_space<smem>>
    %c0_i32 = arith.constant 0 : i32
    %c0_i32_1 = arith.constant 0 : i32
    %1 = tpu.memref_slice %arg2[%0, %c0_i32_1] : memref<100x128xf32, #tpu.memory_space<any>> -> memref<1x128xf32, #tpu.memory_space<any>>
    %c0_i32_2 = arith.constant 0 : i32
    %c0_i32_3 = arith.constant 0 : i32
    %2 = tpu.memref_slice %arg13[%c0_i32_2, %c0_i32_3] : memref<2x128xf32, #tpu.memory_space<vmem>> -> memref<1x128xf32, #tpu.memory_space<vmem>>
    %3 = tpu.memref_slice %arg14[%c0_i32] : memref<2x!tpu.dma_semaphore, #tpu.memory_space<semaphore_mem>> -> memref<1x!tpu.dma_semaphore, #tpu.memory_space<semaphore_mem>>
    %4 = tpu.memref_squeeze %3 : memref<1x!tpu.dma_semaphore, #tpu.memory_space<semaphore_mem>> -> memref<!tpu.dma_semaphore, #tpu.memory_space<semaphore_mem>>
    tpu.enqueue_dma source(%1 : memref<1x128xf32, #tpu.memory_space<any>>) target(%2 : memref<1x128xf32, #tpu.memory_space<vmem>>) target_semaphore(%4 : memref<!tpu.dma_semaphore, #tpu.memory_space<semaphore_mem>>)
    %c1 = arith.constant 1 : index
    %c0_4 = arith.constant 0 : index
    %5 = memref.load %arg1[%c1, %c0_4] : memref<2x8xi32, #tpu.memory_space<smem>>
    %c1_i32 = arith.constant 1 : i32
    %c0_i32_5 = arith.constant 0 : i32
    %6 = tpu.memref_slice %arg2[%5, %c0_i32_5] : memref<100x128xf32, #tpu.memory_space<any>> -> memref<1x128xf32, #tpu.memory_space<any>>
    %c1_i32_6 = arith.constant 1 : i32
    %c0_i32_7 = arith.constant 0 : i32
    %7 = tpu.memref_slice %arg13[%c1_i32_6, %c0_i32_7] : memref<2x128xf32, #tpu.memory_space<vmem>> -> memref<1x128xf32, #tpu.memory_space<vmem>>
    %8 = tpu.memref_slice %arg14[%c1_i32] : memref<2x!tpu.dma_semaphore, #tpu.memory_space<semaphore_mem>> -> memref<1x!tpu.dma_semaphore, #tpu.memory_space<semaphore_mem>>
    %9 = tpu.memref_squeeze %8 : memref<1x!tpu.dma_semaphore, #tpu.memory_space<semaphore_mem>> -> memref<!tpu.dma_semaphore, #tpu.memory_space<semaphore_mem>>
    tpu.enqueue_dma source(%6 : memref<1x128xf32, #tpu.memory_space<any>>) target(%7 : memref<1x128xf32, #tpu.memory_space<vmem>>) target_semaphore(%9 : memref<!tpu.dma_semaphore, #tpu.memory_space<semaphore_mem>>)
    %c0_i32_8 = arith.constant 0 : i32
    %c0_i32_9 = arith.constant 0 : i32
    %10 = tpu.memref_slice %arg2[%0, %c0_i32_9] : memref<100x128xf32, #tpu.memory_space<any>> -> memref<1x128xf32, #tpu.memory_space<any>>
    %c0_i32_10 = arith.constant 0 : i32
    %c0_i32_11 = arith.constant 0 : i32
    %11 = tpu.memref_slice %arg13[%c0_i32_10, %c0_i32_11] : memref<2x128xf32, #tpu.memory_space<vmem>> -> memref<1x128xf32, #tpu.memory_space<vmem>>
    %12 = tpu.memref_slice %arg14[%c0_i32_8] : memref<2x!tpu.dma_semaphore, #tpu.memory_space<semaphore_mem>> -> memref<1x!tpu.dma_semaphore, #tpu.memory_space<semaphore_mem>>
    %13 = tpu.memref_squeeze %12 : memref<1x!tpu.dma_semaphore, #tpu.memory_space<semaphore_mem>> -> memref<!tpu.dma_semaphore, #tpu.memory_space<semaphore_mem>>
    tpu.wait_dma2 semaphore(%13 : memref<!tpu.dma_semaphore, #tpu.memory_space<semaphore_mem>>) src(%10 : memref<1x128xf32, #tpu.memory_space<any>>) dst(%11 : memref<1x128xf32, #tpu.memory_space<vmem>>)
    %c1_i32_12 = arith.constant 1 : i32
    %c0_i32_13 = arith.constant 0 : i32
    %14 = tpu.memref_slice %arg2[%5, %c0_i32_13] : memref<100x128xf32, #tpu.memory_space<any>> -> memref<1x128xf32, #tpu.memory_space<any>>
    %c1_i32_14 = arith.constant 1 : i32
    %c0_i32_15 = arith.constant 0 : i32
    %15 = tpu.memref_slice %arg13[%c1_i32_14, %c0_i32_15] : memref<2x128xf32, #tpu.memory_space<vmem>> -> memref<1x128xf32, #tpu.memory_space<vmem>>
    %16 = tpu.memref_slice %arg14[%c1_i32_12] : memref<2x!tpu.dma_semaphore, #tpu.memory_space<semaphore_mem>> -> memref<1x!tpu.dma_semaphore, #tpu.memory_space<semaphore_mem>>
    %17 = tpu.memref_squeeze %16 : memref<1x!tpu.dma_semaphore, #tpu.memory_space<semaphore_mem>> -> memref<!tpu.dma_semaphore, #tpu.memory_space<semaphore_mem>>
    tpu.wait_dma2 semaphore(%17 : memref<!tpu.dma_semaphore, #tpu.memory_space<semaphore_mem>>) src(%14 : memref<1x128xf32, #tpu.memory_space<any>>) dst(%15 : memref<1x128xf32, #tpu.memory_space<vmem>>)
    %c0_16 = arith.constant 0 : index
    %c0_17 = arith.constant 0 : index
    %18 = vector.load %arg13[%c0_16, %c0_17] : memref<2x128xf32, #tpu.memory_space<vmem>>, vector<2x128xf32>
    %19 = arith.truncf %18 : vector<2x128xf32> to vector<2x128xbf16>
    %c0_18 = arith.constant 0 : index
    %c0_19 = arith.constant 0 : index
    %20 = vector.load %arg3[%c0_18, %c0_19] : memref<2x13xf32, #tpu.memory_space<vmem>>, vector<2x13xf32>
    %21 = arith.truncf %20 : vector<2x13xf32> to vector<2x13xbf16>
    %c0_20 = arith.constant 0 : index
    %c0_21 = arith.constant 0 : index
    %22 = vector.load %arg4[%c0_20, %c0_21] : memref<128x384xbf16, #tpu.memory_space<vmem>>, vector<128x384xbf16>
    %cst = arith.constant dense<0.000000e+00> : vector<2x384xf32>
    %23 = tpu.matmul %19, %22, %cst {dimension_numbers = #tpu.dot_dimension_numbers<[1], [0], [0], [1], [0, 0, 1, 1], [], []>} : vector<2x128xbf16>, vector<128x384xbf16>, vector<2x384xf32> -> vector<2x384xf32>
    %c0_22 = arith.constant 0 : index
    %c0_23 = arith.constant 0 : index
    %24 = vector.load %arg5[%c0_22, %c0_23] : memref<1x384xf32, #tpu.memory_space<vmem>>, vector<1x384xf32>
    %25 = vector.broadcast %24 : vector<1x384xf32> to vector<2x384xf32>
    %26 = arith.addf %23, %25 : vector<2x384xf32>
    %27 = vector.extract_strided_slice %26 {offsets = [0, 0], sizes = [2, 128], strides = [1, 1]} : vector<2x384xf32> to vector<2x128xf32>
    %28 = vector.extract_strided_slice %26 {offsets = [0, 128], sizes = [2, 128], strides = [1, 1]} : vector<2x384xf32> to vector<2x128xf32>
    %29 = vector.extract_strided_slice %26 {offsets = [0, 256], sizes = [2, 128], strides = [1, 1]} : vector<2x384xf32> to vector<2x128xf32>
    %c0_24 = arith.constant 0 : index
    %c0_25 = arith.constant 0 : index
    %30 = vector.load %arg6[%c0_24, %c0_25] : memref<13x256xbf16, #tpu.memory_space<vmem>>, vector<13x256xbf16>
    %cst_26 = arith.constant dense<0.000000e+00> : vector<2x256xf32>
    %31 = tpu.matmul %21, %30, %cst_26 {dimension_numbers = #tpu.dot_dimension_numbers<[1], [0], [0], [1], [0, 0, 1, 1], [], []>} : vector<2x13xbf16>, vector<13x256xbf16>, vector<2x256xf32> -> vector<2x256xf32>
    %c0_27 = arith.constant 0 : index
    %c0_28 = arith.constant 0 : index
    %32 = vector.load %arg7[%c0_27, %c0_28] : memref<1x256xf32, #tpu.memory_space<vmem>>, vector<1x256xf32>
    %33 = vector.broadcast %32 : vector<1x256xf32> to vector<2x256xf32>
    %34 = arith.addf %31, %33 : vector<2x256xf32>
    %35 = vector.extract_strided_slice %34 {offsets = [0, 0], sizes = [2, 128], strides = [1, 1]} : vector<2x256xf32> to vector<2x128xf32>
    %36 = vector.extract_strided_slice %34 {offsets = [0, 128], sizes = [2, 128], strides = [1, 1]} : vector<2x256xf32> to vector<2x128xf32>
    %37 = arith.subf %28, %35 : vector<2x128xf32>
    %38 = arith.mulf %27, %37 : vector<2x128xf32>
    %c0_29 = arith.constant 0 : index
    %c0_30 = arith.constant 0 : index
    %39 = vector.load %arg10[%c0_29, %c0_30] : memref<128x4xf32, #tpu.memory_space<vmem>>, vector<128x4xf32>
    %cst_31 = arith.constant dense<0.000000e+00> : vector<2x4xf32>
    %40 = tpu.matmul %38, %39, %cst_31 {dimension_numbers = #tpu.dot_dimension_numbers<[1], [0], [0], [1], [0, 0, 1, 1], [], []>} : vector<2x128xf32>, vector<128x4xf32>, vector<2x4xf32> -> vector<2x4xf32>
    %cst_32 = arith.constant 0.000000e+00 : f32
    %41 = vector.broadcast %cst_32 : f32 to vector<2x4xf32>
    %42 = arith.subf %41, %40 : vector<2x4xf32>
    %43 = math.exp %42 : vector<2x4xf32>
    %cst_33 = arith.constant 1.000000e+00 : f32
    %44 = vector.broadcast %cst_33 : f32 to vector<2x4xf32>
    %45 = arith.addf %44, %43 : vector<2x4xf32>
    %46 = tpu.reciprocal %45 {approx = true} : vector<2x4xf32> -> vector<2x4xf32>
    %c0_34 = arith.constant 0 : index
    %c0_35 = arith.constant 0 : index
    %47 = vector.load %arg11[%c0_34, %c0_35] : memref<4x128xf32, #tpu.memory_space<vmem>>, vector<4x128xf32>
    %cst_36 = arith.constant dense<0.000000e+00> : vector<2x128xf32>
    %48 = tpu.matmul %46, %47, %cst_36 {dimension_numbers = #tpu.dot_dimension_numbers<[1], [0], [0], [1], [0, 0, 1, 1], [], []>} : vector<2x4xf32>, vector<4x128xf32>, vector<2x128xf32> -> vector<2x128xf32>
    %49 = arith.subf %29, %36 : vector<2x128xf32>
    %50 = arith.mulf %48, %49 : vector<2x128xf32>
    %51 = arith.addf %36, %50 : vector<2x128xf32>
    %52 = arith.truncf %51 : vector<2x128xf32> to vector<2x128xbf16>
    %c0_37 = arith.constant 0 : index
    %c0_38 = arith.constant 0 : index
    %53 = vector.load %arg8[%c0_37, %c0_38] : memref<128x2xbf16, #tpu.memory_space<vmem>>, vector<128x2xbf16>
    %cst_39 = arith.constant dense<0.000000e+00> : vector<2x2xf32>
    %54 = tpu.matmul %52, %53, %cst_39 {dimension_numbers = #tpu.dot_dimension_numbers<[1], [0], [0], [1], [0, 0, 1, 1], [], []>} : vector<2x128xbf16>, vector<128x2xbf16>, vector<2x2xf32> -> vector<2x2xf32>
    %c0_40 = arith.constant 0 : index
    %c0_41 = arith.constant 0 : index
    %55 = vector.load %arg9[%c0_40, %c0_41] : memref<1x2xf32, #tpu.memory_space<vmem>>, vector<1x2xf32>
    %56 = vector.broadcast %55 : vector<1x2xf32> to vector<2x2xf32>
    %57 = arith.addf %54, %56 : vector<2x2xf32>
    %c0_42 = arith.constant 0 : index
    %c0_43 = arith.constant 0 : index
    %58 = vector.load %arg12[%c0_42, %c0_43] : memref<2x2xf32, #tpu.memory_space<vmem>>, vector<2x2xf32>
    tpu.vector_store %arg12[%c0_42, %c0_43], %57 {strides = array<i32>} : memref<2x2xf32, #tpu.memory_space<vmem>>, vector<2x2xf32>,
    return
  }
  func.func @transform_1(%arg0: i32, %arg1: memref<2x8xi32, #tpu.memory_space<smem>>) -> (i32, i32) {
    %c0_i32 = arith.constant 0 : i32
    %c0_i32_0 = arith.constant 0 : i32
    %c0_i32_1 = arith.constant 0 : i32
    return %c0_i32, %c0_i32_0 : i32, i32
  }
  func.func @transform_2(%arg0: i32, %arg1: memref<2x8xi32, #tpu.memory_space<smem>>) -> (i32, i32) {
    %c0_i32 = arith.constant 0 : i32
    %c0_i32_0 = arith.constant 0 : i32
    %c0_i32_1 = arith.constant 0 : i32
    return %c0_i32, %c0_i32_0 : i32, i32
  }
  func.func @transform_3(%arg0: i32, %arg1: memref<2x8xi32, #tpu.memory_space<smem>>) -> (i32, i32) {
    %c0_i32 = arith.constant 0 : i32
    %c0_i32_0 = arith.constant 0 : i32
    %c0_i32_1 = arith.constant 0 : i32
    return %c0_i32, %c0_i32_0 : i32, i32
  }
  func.func @transform_4(%arg0: i32, %arg1: memref<2x8xi32, #tpu.memory_space<smem>>) -> (i32, i32) {
    %c0_i32 = arith.constant 0 : i32
    %c0_i32_0 = arith.constant 0 : i32
    %c0_i32_1 = arith.constant 0 : i32
    return %c0_i32, %c0_i32_0 : i32, i32
  }
  func.func @transform_5(%arg0: i32, %arg1: memref<2x8xi32, #tpu.memory_space<smem>>) -> (i32, i32) {
    %c0_i32 = arith.constant 0 : i32
    %c0_i32_0 = arith.constant 0 : i32
    %c0_i32_1 = arith.constant 0 : i32
    return %c0_i32, %c0_i32_0 : i32, i32
  }
  func.func @transform_6(%arg0: i32, %arg1: memref<2x8xi32, #tpu.memory_space<smem>>) -> (i32, i32) {
    %c0_i32 = arith.constant 0 : i32
    %c0_i32_0 = arith.constant 0 : i32
    %c0_i32_1 = arith.constant 0 : i32
    return %c0_i32, %c0_i32_0 : i32, i32
  }
  func.func @transform_7(%arg0: i32, %arg1: memref<2x8xi32, #tpu.memory_space<smem>>) -> (i32, i32) {
    %c0_i32 = arith.constant 0 : i32
    %c0_i32_0 = arith.constant 0 : i32
    %c0_i32_1 = arith.constant 0 : i32
    return %c0_i32, %c0_i32_0 : i32, i32
  }
  func.func @transform_8(%arg0: i32, %arg1: memref<2x8xi32, #tpu.memory_space<smem>>) -> (i32, i32) {
    %c0_i32 = arith.constant 0 : i32
    %c0_i32_0 = arith.constant 0 : i32
    %c0_i32_1 = arith.constant 0 : i32
    return %c0_i32, %c0_i32_0 : i32, i32
  }
  func.func @transform_9(%arg0: i32, %arg1: memref<2x8xi32, #tpu.memory_space<smem>>) -> (i32, i32) {
    %c0_i32 = arith.constant 0 : i32
    %c0_i32_0 = arith.constant 0 : i32
    %c0_i32_1 = arith.constant 0 : i32
    return %c0_i32, %c0_i32_0 : i32, i32
  }
  func.func @transform_10(%arg0: i32, %arg1: memref<2x8xi32, #tpu.memory_space<smem>>) -> (i32, i32) {
    %c0_i32 = arith.constant 0 : i32
    %c0_i32_0 = arith.constant 0 : i32
    %c0_i32_1 = arith.constant 0 : i32
    return %c0_i32, %c0_i32_0 : i32, i32
  }
}

</mosaic_0001>

<llo_original>
// kernel: tpu_custom_call.1
$region0: #{tpu_custom_call.1}
  #allocation0 [shape = 'u32[]', space=smem, size = 0x4, offset = 0x4, fixed_abs, tag = 'smem constant byte address 0x4 - core index']
  #allocation1 [shape = 'u32[72,128]{1,0:T(1,128)}', space=vmem, size = 0x9000, scoped, tag = 'internal scratch']
  #allocation2 [shape = 'f32[2,128]{1,0:T(2,128)}', space=vmem, size = 0x400, scoped, tag = 'scratch operand']
  #allocation3 [shape = 's32[2]{0}', space=sflag, size = 0x8, scoped, tag = 'scratch operand']
  #allocation4 [shape = 's32[1]{0}', space=sflag, size = 0x4, scoped, tag = 'scoped memory for tpu_custom_call.1']
  #allocation5 [shape = 'u8[1024]{0}', space=smem, size = 0x400, scoped, tag = 'prefetched SMEM operand 0']
  #allocation15 [shape = 's32[]', space=sflag, size = 0x4, offset = 0, fixed_abs, tag = 'sflag constant byte address 0x0 - dummy sync flag']
  #allocation16 [shape = 's32[]', space=sflag, size = 0x4, offset = 0, fixed_abs, tag = 'sflag constant byte address 0x0 - dummy sync flag']
  #allocation17 [shape = 'u32[]', space=smem, size = 0x4, offset = 0x44, fixed_abs, tag = 'smem constant byte address 0x44 - assertion arg 0']
  #allocation18 [shape = 'u32[]', space=smem, size = 0x4, offset = 0x48, fixed_abs, tag = 'smem constant byte address 0x48 - assertion arg 1']
  #allocation19 [shape = 's32[]', space=sflag, size = 0x4, offset = 0, fixed_abs, tag = 'sflag constant byte address 0x0 - dummy sync flag']
  #allocation20 [shape = 's32[]', space=sflag, size = 0x4, offset = 0, fixed_abs, tag = 'sflag constant byte address 0x0 - dummy sync flag']
  %s0 = inlined_call_operand.hbm [shape: s32[2,8], index: 0, kind: input, shape index: {}]
  %s1 = inlined_call_operand.hbm [shape: f32[100,128], index: 1, kind: input, shape index: {}]
  %s2 = inlined_call_operand.hbm [shape: f32[2,13], index: 2, kind: input, shape index: {}]
  %s3 = inlined_call_operand.vmem [shape: bf16[128,384], index: 3, kind: input, shape index: {}]
  %s4 = inlined_call_operand.hbm [shape: f32[1,384], index: 4, kind: input, shape index: {}]
  %s5 = inlined_call_operand.hbm [shape: bf16[13,256], index: 5, kind: input, shape index: {}]
  %s6 = inlined_call_operand.hbm [shape: f32[1,256], index: 6, kind: input, shape index: {}]
  %s7 = inlined_call_operand.vmem [shape: bf16[128,2], index: 7, kind: input, shape index: {}]
  %s8 = inlined_call_operand.vmem [shape: f32[1,2], index: 8, kind: input, shape index: {}]
  %s9 = inlined_call_operand.vmem [shape: f32[128,4], index: 9, kind: input, shape index: {}]
  %s10 = inlined_call_operand.vmem [shape: f32[4,128], index: 10, kind: input, shape index: {}]
  %s11 = inlined_call_operand.hbm [shape: f32[2,2], index: 11, kind: output, shape index: {}]
  %s12 = sld [smem:[#allocation0]]
  $region70: #{tpu_custom_call.1} parent=0
    _
  %s14 = ssub.s32 1, %s12
  %s15 = scalar_select 0, %s14, %s12
  %s17 = sshll.u32 %s0, 4
  %s18 = int_to_ptr.hbm [resolvable:$true] %s17
  %20 = dma.hbm_to_smem %s18, 32, [#allocation5], [#allocation4]
  %22 = dma.done [#allocation4], 32
  %23 = sfence
  $region1: #{tpu_custom_call.1} parent=0
    #allocation6 [shape = 'u8[1024]{0}', space=vmem, size = 0x400, scoped, tag = 'input window, operand 2, single buffered']
    #allocation7 [shape = 's32[1]{0}', space=sflag, size = 0x4, scoped, tag = 'scoped memory for tpu_custom_call.1']
    #allocation8 [shape = 's32[1]{0}', space=sflag, size = 0x4, scoped, tag = 'scoped memory for tpu_custom_call.1']
    #allocation9 [shape = 'u8[1536]{0}', space=vmem, size = 0x800, scoped, tag = 'input window, operand 4, single buffered']
    #allocation10 [shape = 's32[1]{0}', space=sflag, size = 0x4, scoped, tag = 'scoped memory for tpu_custom_call.1']
    #allocation11 [shape = 'u8[8192]{0}', space=vmem, size = 0x2000, scoped, tag = 'input window, operand 5, single buffered']
    #allocation12 [shape = 'u8[1024]{0}', space=vmem, size = 0x400, scoped, tag = 'input window, operand 6, single buffered']
    #allocation13 [shape = 's32[1]{0}', space=sflag, size = 0x4, scoped, tag = 'scoped memory for tpu_custom_call.1']
    #allocation14 [shape = 'u8[1024]{0}', space=vmem, size = 0x400, scoped, tag = 'output window, operand 0, single buffered']
    %24 = vsyncpa [#allocation7], 0
    %25 = vsyncpa [#allocation10], 0
    %26 = vsyncpa [#allocation13], 0
    %27 = vsyncpa [#allocation8], 0
    // Predicated region
    $region2: #{tpu_custom_call.1} parent=1 // pred_check
      _
    $region3: #{tpu_custom_call.1} parent=1 // pred_check_branch
      %29 = sbr.rel (0) target = $region5
    $region4: #{tpu_custom_call.1} parent=1 // pred_region
      %31 = vsyncadd [#allocation7], 0
      %s33 = sshll.u32 %s2, 4
      %s34 = int_to_ptr.hbm [resolvable:$true] %s33
      %s35 = sshll.u32 [#allocation6], 4
      %s36 = int_to_ptr.vmem [resolvable:$true] %s35
      %38 = dma.hbm_to_vmem [thread:$0]  %s34, 32, %s36, [#allocation7]
    $region5: #{tpu_custom_call.1} parent=1 // pred_fallthru
      _
    // Predicated region
    $region6: #{tpu_custom_call.1} parent=1 // pred_check
      _
    $region7: #{tpu_custom_call.1} parent=1 // pred_check_branch
      %40 = sbr.rel (0) target = $region9
    $region8: #{tpu_custom_call.1} parent=1 // pred_region
      _
    $region9: #{tpu_custom_call.1} parent=1 // pred_fallthru
      _
    // Predicated region
    $region10: #{tpu_custom_call.1} parent=1 // pred_check
      _
    $region11: #{tpu_custom_call.1} parent=1 // pred_check_branch
      %42 = sbr.rel (0) target = $region13
    $region12: #{tpu_custom_call.1} parent=1 // pred_region
      %44 = vsyncadd [#allocation10], 0
      %s46 = sshll.u32 %s4, 4
      %s47 = int_to_ptr.hbm [resolvable:$true] %s46
      %s48 = sshll.u32 [#allocation9], 4
      %s49 = int_to_ptr.vmem [resolvable:$true] %s48
      %51 = dma.hbm_to_vmem [thread:$0]  %s47, 48, %s49, [#allocation10]
    $region13: #{tpu_custom_call.1} parent=1 // pred_fallthru
      _
    // Predicated region
    $region14: #{tpu_custom_call.1} parent=1 // pred_check
      _
    $region15: #{tpu_custom_call.1} parent=1 // pred_check_branch
      %53 = sbr.rel (0) target = $region17
    $region16: #{tpu_custom_call.1} parent=1 // pred_region
      %55 = vsyncadd [#allocation10], 0
      %s56 = sshll.u32 %s5, 4
      %s57 = int_to_ptr.hbm [resolvable:$true] %s56
      %s58 = sshll.u32 [#allocation11], 4
      %s59 = int_to_ptr.vmem [resolvable:$true] %s58
      %64 = dma.hbm_to_vmem [thread:$0]  %s57, 256, %s59, [#allocation10], 128, 128, 8
    $region17: #{tpu_custom_call.1} parent=1 // pred_fallthru
      _
    // Predicated region
    $region18: #{tpu_custom_call.1} parent=1 // pred_check
      _
    $region19: #{tpu_custom_call.1} parent=1 // pred_check_branch
      %66 = sbr.rel (0) target = $region21
    $region20: #{tpu_custom_call.1} parent=1 // pred_region
      %68 = vsyncadd [#allocation13], 0
      %s70 = sshll.u32 %s6, 4
      %s71 = int_to_ptr.hbm [resolvable:$true] %s70
      %s72 = sshll.u32 [#allocation12], 4
      %s73 = int_to_ptr.vmem [resolvable:$true] %s72
      %75 = dma.hbm_to_vmem [thread:$0]  %s71, 32, %s73, [#allocation13]
    $region21: #{tpu_custom_call.1} parent=1 // pred_fallthru
      _
    // Predicated region
    $region22: #{tpu_custom_call.1} parent=1 // pred_check
      _
    $region23: #{tpu_custom_call.1} parent=1 // pred_check_branch
      %77 = sbr.rel (0) target = $region25
    $region24: #{tpu_custom_call.1} parent=1 // pred_region
      _
    $region25: #{tpu_custom_call.1} parent=1 // pred_fallthru
      _
    // Predicated region
    $region26: #{tpu_custom_call.1} parent=1 // pred_check
      _
    $region27: #{tpu_custom_call.1} parent=1 // pred_check_branch
      %79 = sbr.rel (0) target = $region29
    $region28: #{tpu_custom_call.1} parent=1 // pred_region
      _
    $region29: #{tpu_custom_call.1} parent=1 // pred_fallthru
      _
    // Predicated region
    $region30: #{tpu_custom_call.1} parent=1 // pred_check
      _
    $region31: #{tpu_custom_call.1} parent=1 // pred_check_branch
      %81 = sbr.rel (0) target = $region33
    $region32: #{tpu_custom_call.1} parent=1 // pred_region
      _
    $region33: #{tpu_custom_call.1} parent=1 // pred_fallthru
      _
    // Predicated region
    $region34: #{tpu_custom_call.1} parent=1 // pred_check
      _
    $region35: #{tpu_custom_call.1} parent=1 // pred_check_branch
      %83 = sbr.rel (0) target = $region37
    $region36: #{tpu_custom_call.1} parent=1 // pred_region
      _
    $region37: #{tpu_custom_call.1} parent=1 // pred_fallthru
      _
    // Predicated region
    $region38: #{tpu_custom_call.1} parent=1 // pred_check
      _
    $region39: #{tpu_custom_call.1} parent=1 // pred_check_branch
      %85 = sbr.rel (0) target = $region41
    $region40: #{tpu_custom_call.1} parent=1 // pred_region
      %87 = dma.done [#allocation7], 32
    $region41: #{tpu_custom_call.1} parent=1 // pred_fallthru
      _
    // Predicated region
    $region42: #{tpu_custom_call.1} parent=1 // pred_check
      _
    $region43: #{tpu_custom_call.1} parent=1 // pred_check_branch
      %89 = sbr.rel (0) target = $region45
    $region44: #{tpu_custom_call.1} parent=1 // pred_region
      %91 = dma.done [#allocation10], 48
    $region45: #{tpu_custom_call.1} parent=1 // pred_fallthru
      _
    // Predicated region
    $region46: #{tpu_custom_call.1} parent=1 // pred_check
      _
    $region47: #{tpu_custom_call.1} parent=1 // pred_check_branch
      %93 = sbr.rel (0) target = $region49
    $region48: #{tpu_custom_call.1} parent=1 // pred_region
      %95 = dma.done [#allocation10], 256
    $region49: #{tpu_custom_call.1} parent=1 // pred_fallthru
      _
    // Predicated region
    $region50: #{tpu_custom_call.1} parent=1 // pred_check
      _
    $region51: #{tpu_custom_call.1} parent=1 // pred_check_branch
      %97 = sbr.rel (0) target = $region53
    $region52: #{tpu_custom_call.1} parent=1 // pred_region
      %99 = dma.done [#allocation13], 32
    $region53: #{tpu_custom_call.1} parent=1 // pred_fallthru
      _
    %s101 = sld [smem:[#allocation5]]
    %s102 = scalar_lea.hbm %s1, %s101
    // Predicated region
    $region54: #{tpu_custom_call.1} parent=1 // pred_check
      _
    $region55: #{tpu_custom_call.1} parent=1 // pred_check_branch
      %104 = sbr.rel target = $region57
    $region56: #{tpu_custom_call.1} parent=1 // pred_region
      %105 = sst [smem:[#allocation17]] [#allocation16]
      %106 = sst [smem:[#allocation18]] [#allocation15]
    $region57: #{tpu_custom_call.1} parent=1 // pred_fallthru
      _
    %108 = shalt.err (0)
    %s110 = sshll.u32 %s102, 4
    %s111 = int_to_ptr.hbm [resolvable:$true] %s110
    %s112 = sshll.u32 [#allocation2], 4
    %s113 = int_to_ptr.vmem [resolvable:$true] %s112
    %115 = dma.hbm_to_vmem [thread:$0]  %s111, 16, %s113, [#allocation3]
    %s116 = sld [smem:[#allocation5 + $0x80]]
    %s117 = scalar_lea.hbm %s1, %s116
    %s118 = scalar_lea.vmem [#allocation2], 1
    %s119 = scalar_lea.sflag [#allocation3], 1
    // Predicated region
    $region58: #{tpu_custom_call.1} parent=1 // pred_check
      _
    $region59: #{tpu_custom_call.1} parent=1 // pred_check_branch
      %121 = sbr.rel target = $region61
    $region60: #{tpu_custom_call.1} parent=1 // pred_region
      %122 = sst [smem:[#allocation17]] [#allocation20]
      %123 = sst [smem:[#allocation18]] [#allocation19]
    $region61: #{tpu_custom_call.1} parent=1 // pred_fallthru
      _
    %125 = shalt.err (0)
    %s127 = sshll.u32 %s117, 4
    %s128 = int_to_ptr.hbm [resolvable:$true] %s127
    %s129 = sshll.u32 %s118, 4
    %s130 = int_to_ptr.vmem [resolvable:$true] %s129
    %132 = dma.hbm_to_vmem [thread:$0]  %s128, 16, %s130, %s119
    %s133 = smul.u32 1, 1
    %s134 = sshll.u32 %s133, 4
    %135 = dma.done [#allocation3], %s134
    %s136 = sshll.u32 %s133, 4
    %137 = dma.done %s119, %s136
    %v138 = vld [vmem:[#allocation2] sm:$0x3]
    %v139 = vpack.c.bf16 %v138, %v138
    %v140 = vld [vmem:[#allocation6] sm:$0x3]
    %v141 = vpack.c.bf16 %v140, %v140
    %v142 = vld [vmem:[%s3] sm:$0xff]
    %v143 = vld [vmem:[%s3 + $0x8] sm:$0xf]
    %v144 = vld [vmem:[%s3 + $0xc] sm:$0xff]
    %v145 = vld [vmem:[%s3 + $0x14] sm:$0xf]
    %v146 = vld [vmem:[%s3 + $0x18] sm:$0xff]
    %v147 = vld [vmem:[%s3 + $0x20] sm:$0xf]
    %v148 = vld [vmem:[%s3 + $0x24] sm:$0xff]
    %v149 = vld [vmem:[%s3 + $0x2c] sm:$0xf]
    %v150 = vld [vmem:[%s3 + $0x30] sm:$0xff]
    %v151 = vld [vmem:[%s3 + $0x38] sm:$0xf]
    %v152 = vld [vmem:[%s3 + $0x3c] sm:$0xff]
    %v153 = vld [vmem:[%s3 + $0x44] sm:$0xf]
    %v154 = vld [vmem:[%s3 + $0x48] sm:$0xff]
    %v155 = vld [vmem:[%s3 + $0x50] sm:$0xf]
    %v156 = vld [vmem:[%s3 + $0x54] sm:$0xff]
    %v157 = vld [vmem:[%s3 + $0x5c] sm:$0xf]
    %v158 = vld [vmem:[%s3 + $0x60] sm:$0xff]
    %v159 = vld [vmem:[%s3 + $0x68] sm:$0xf]
    %v160 = vld [vmem:[%s3 + $0x6c] sm:$0xff]
    %v161 = vld [vmem:[%s3 + $0x74] sm:$0xf]
    %v162 = vld [vmem:[%s3 + $0x78] sm:$0xff]
    %v163 = vld [vmem:[%s3 + $0x80] sm:$0xf]
    %v164 = vld [vmem:[%s3 + $0x84] sm:$0xff]
    %v165 = vld [vmem:[%s3 + $0x8c] sm:$0xf]
    %v166 = vld [vmem:[%s3 + $0x90] sm:$0xff]
    %v167 = vld [vmem:[%s3 + $0x98] sm:$0xf]
    %v168 = vld [vmem:[%s3 + $0x9c] sm:$0xff]
    %v169 = vld [vmem:[%s3 + $0xa4] sm:$0xf]
    %v170 = vld [vmem:[%s3 + $0xa8] sm:$0xff]
    %v171 = vld [vmem:[%s3 + $0xb0] sm:$0xf]
    %v172 = vld [vmem:[%s3 + $0xb4] sm:$0xff]
    %v173 = vld [vmem:[%s3 + $0xbc] sm:$0xf]
    %v174 = vld [vmem:[#allocation9] sm:$0x7]
    %v176 = vperm.slane %v174, 0
    %v177 = vperm.slane %v174, 1
    %v178 = vperm.slane %v174, 2
    %v214 = vunpack.c.l.b16 %v142
    %v215 = vunpack.c.h.b16 %v142
    %v216 = vunpack.c.l.b16 %v143
    %v217 = vunpack.c.l.b16 %v144
    %v218 = vunpack.c.h.b16 %v144
    %v219 = vunpack.c.l.b16 %v145
    %v220 = vunpack.c.l.b16 %v146
    %v221 = vunpack.c.h.b16 %v146
    %v222 = vunpack.c.l.b16 %v147
    %v223 = vunpack.c.l.b16 %v148
    %v224 = vunpack.c.h.b16 %v148
    %v225 = vunpack.c.l.b16 %v149
    %v226 = vunpack.c.l.b16 %v150
    %v227 = vunpack.c.h.b16 %v150
    %v228 = vunpack.c.l.b16 %v151
    %v229 = vunpack.c.l.b16 %v152
    %v230 = vunpack.c.h.b16 %v152
    %v231 = vunpack.c.l.b16 %v153
    %v232 = vunpack.c.l.b16 %v154
    %v233 = vunpack.c.h.b16 %v154
    %v234 = vunpack.c.l.b16 %v155
    %v235 = vunpack.c.l.b16 %v156
    %v236 = vunpack.c.h.b16 %v156
    %v237 = vunpack.c.l.b16 %v157
    %v238 = vunpack.c.l.b16 %v158
    %v239 = vunpack.c.h.b16 %v158
    %v240 = vunpack.c.l.b16 %v159
    %v241 = vunpack.c.l.b16 %v160
    %v242 = vunpack.c.h.b16 %v160
    %v243 = vunpack.c.l.b16 %v161
    %v244 = vunpack.c.l.b16 %v162
    %v245 = vunpack.c.h.b16 %v162
    %v246 = vunpack.c.l.b16 %v163
    %v247 = vunpack.c.l.b16 %v164
    %v248 = vunpack.c.h.b16 %v164
    %v249 = vunpack.c.l.b16 %v165
    %v250 = vunpack.c.l.b16 %v166
    %v251 = vunpack.c.h.b16 %v166
    %v252 = vunpack.c.l.b16 %v167
    %v253 = vunpack.c.l.b16 %v168
    %v254 = vunpack.c.h.b16 %v168
    %v255 = vunpack.c.l.b16 %v169
    %v256 = vunpack.c.l.b16 %v170
    %v257 = vunpack.c.h.b16 %v170
    %v258 = vunpack.c.l.b16 %v171
    %v259 = vunpack.c.l.b16 %v172
    %v260 = vunpack.c.h.b16 %v172
    %v261 = vunpack.c.l.b16 %v173
    %v262 = vpack.c.b16 %v217, %v214
    %v263 = vpack.c.b16 %v218, %v215
    %v264 = vpack.c.b16 %v219, %v216
    %v265 = vpack.c.b16 %v223, %v220
    %v266 = vpack.c.b16 %v224, %v221
    %v267 = vpack.c.b16 %v225, %v222
    %v268 = vpack.c.b16 %v229, %v226
    %v269 = vpack.c.b16 %v230, %v227
    %v270 = vpack.c.b16 %v231, %v228
    %v271 = vpack.c.b16 %v235, %v232
    %v272 = vpack.c.b16 %v236, %v233
    %v273 = vpack.c.b16 %v237, %v234
    %v274 = vpack.c.b16 %v241, %v238
    %v275 = vpack.c.b16 %v242, %v239
    %v276 = vpack.c.b16 %v243, %v240
    %v277 = vpack.c.b16 %v247, %v244
    %v278 = vpack.c.b16 %v248, %v245
    %v279 = vpack.c.b16 %v249, %v246
    %v280 = vpack.c.b16 %v253, %v250
    %v281 = vpack.c.b16 %v254, %v251
    %v282 = vpack.c.b16 %v255, %v252
    %v283 = vpack.c.b16 %v259, %v256
    %v284 = vpack.c.b16 %v260, %v257
    %v285 = vpack.c.b16 %v261, %v258
    %310 = vmatpush.bf16.msra.mxu0 %v283
    %311 = vmatpush.bf16.msra.mxu0 %v280
    %312 = vmatpush.bf16.msra.mxu0 %v277
    %313 = vmatpush.bf16.msra.mxu0 %v274
    %314 = vmatpush.bf16.msra.mxu0 %v271
    %315 = vmatpush.bf16.msra.mxu0 %v268
    %316 = vmatpush.bf16.msra.mxu0 %v265
    %317 = vmatpush.bf16.msra.mxu0 %v262
    %318 = vmatmul.bf16.gmra.mxu0 %v139
    %v319 = vpop.f32.mrf.mxu0
    %v320 = vadd.f32 %v176, %v319
    %v321 = vpop.f32.mrf.mxu0
    %322 = vdwg.mxu0
    %323 = vmatpush.bf16.msra.mxu0 %v284
    %324 = vmatpush.bf16.msra.mxu0 %v281
    %325 = vmatpush.bf16.msra.mxu0 %v278
    %326 = vmatpush.bf16.msra.mxu0 %v275
    %327 = vmatpush.bf16.msra.mxu0 %v272
    %328 = vmatpush.bf16.msra.mxu0 %v269
    %329 = vmatpush.bf16.msra.mxu0 %v266
    %330 = vmatpush.bf16.msra.mxu0 %v263
    %331 = vmatmul.bf16.gmra.mxu0 %v139
    %v332 = vpop.f32.mrf.mxu0
    %v333 = vadd.f32 %v177, %v332
    %v334 = vpop.f32.mrf.mxu0
    %335 = vdwg.mxu0
    %336 = vmatpush.bf16.msra.mxu0 %v285
    %337 = vmatpush.bf16.msra.mxu0 %v282
    %338 = vmatpush.bf16.msra.mxu0 %v279
    %339 = vmatpush.bf16.msra.mxu0 %v276
    %340 = vmatpush.bf16.msra.mxu0 %v273
    %341 = vmatpush.bf16.msra.mxu0 %v270
    %342 = vmatpush.bf16.msra.mxu0 %v267
    %343 = vmatpush.bf16.msra.mxu0 %v264
    %344 = vmatmul.bf16.gmra.mxu0 %v139
    %v345 = vpop.f32.mrf.mxu0
    %v346 = vadd.f32 %v178, %v345
    %v347 = vpop.f32.mrf.mxu0
    %348 = vdwg.mxu0
    %v349 = vld [vmem:[#allocation11] sm:$0xff]
    %v350 = vld [vmem:[#allocation11 + $0x8] sm:$0x77]
    %v351 = vld [vmem:[#allocation12] sm:$0x3]
    %v353 = vperm.slane %v351, 0
    %v354 = vperm.slane %v351, 1
    %v359 = vunpack.c.l.b16 %v349
    %v360 = vunpack.c.h.b16 %v349
    %v361 = vunpack.c.l.b16 %v350
    %v362 = vunpack.c.h.b16 %v350
    %v363 = vpack.c.b16 %v361, %v359
    %v364 = vpack.c.b16 %v362, %v360
    %vm365 = vcmask 105472
    %v367 = vsel %vm365, %v141, 0
    %vm369 = vcmask 1045504
    %vm370 = vcmask 1046528
    %v371 = vsel %vm369, 4294967295, 65535
    %v372 = vsel %vm370, %v371, 0
    %v374 = vand.u32 %v363, %v372
    %v377 = vand.u32 %v364, %v372
    %379 = vmatpush.bf16.msra.mxu0 0
    %380 = vmatpush.bf16.msra.mxu0 0
    %381 = vmatpush.bf16.msra.mxu0 0
    %382 = vmatpush.bf16.msra.mxu0 0
    %383 = vmatpush.bf16.msra.mxu0 0
    %384 = vmatpush.bf16.msra.mxu0 0
    %385 = vmatpush.bf16.msra.mxu0 0
    %386 = vmatpush.bf16.msra.mxu0 %v374
    %387 = vmatmul.bf16.gmra.mxu0 %v367
    %v388 = vpop.f32.mrf.mxu0
    %v389 = vadd.f32 %v353, %v388
    %v390 = vpop.f32.mrf.mxu0
    %391 = vdwg.mxu0
    %392 = vmatpush.bf16.msra.mxu0 0
    %393 = vmatpush.bf16.msra.mxu0 0
    %394 = vmatpush.bf16.msra.mxu0 0
    %395 = vmatpush.bf16.msra.mxu0 0
    %396 = vmatpush.bf16.msra.mxu0 0
    %397 = vmatpush.bf16.msra.mxu0 0
    %398 = vmatpush.bf16.msra.mxu0 0
    %399 = vmatpush.bf16.msra.mxu0 %v377
    %400 = vmatmul.bf16.gmra.mxu0 %v367
    %v401 = vpop.f32.mrf.mxu0
    %v402 = vadd.f32 %v354, %v401
    %v403 = vpop.f32.mrf.mxu0
    %404 = vdwg.mxu0
    %v405 = vsub.f32 %v333, %v389
    %v406 = vmul.f32 %v320, %v405
    %v407 = vld [vmem:[%s9] sm:$0xff]
    %v408 = vld [vmem:[%s9 + $0x8] sm:$0xff]
    %v409 = vld [vmem:[%s9 + $0x10] sm:$0xff]
    %v410 = vld [vmem:[%s9 + $0x18] sm:$0xff]
    %v411 = vld [vmem:[%s9 + $0x20] sm:$0xff]
    %v412 = vld [vmem:[%s9 + $0x28] sm:$0xff]
    %v413 = vld [vmem:[%s9 + $0x30] sm:$0xff]
    %v414 = vld [vmem:[%s9 + $0x38] sm:$0xff]
    %v415 = vld [vmem:[%s9 + $0x40] sm:$0xff]
    %v416 = vld [vmem:[%s9 + $0x48] sm:$0xff]
    %v417 = vld [vmem:[%s9 + $0x50] sm:$0xff]
    %v418 = vld [vmem:[%s9 + $0x58] sm:$0xff]
    %v419 = vld [vmem:[%s9 + $0x60] sm:$0xff]
    %v420 = vld [vmem:[%s9 + $0x68] sm:$0xff]
    %v421 = vld [vmem:[%s9 + $0x70] sm:$0xff]
    %v422 = vld [vmem:[%s9 + $0x78] sm:$0xff]
    %423 = vmatpush.msra.mxu0 %v422
    %424 = vmatpush.msra.mxu0 %v421
    %425 = vmatpush.msra.mxu0 %v420
    %426 = vmatpush.msra.mxu0 %v419
    %427 = vmatpush.msra.mxu0 %v418
    %428 = vmatpush.msra.mxu0 %v417
    %429 = vmatpush.msra.mxu0 %v416
    %430 = vmatpush.msra.mxu0 %v415
    %431 = vmatpush.msra.mxu0 %v414
    %432 = vmatpush.msra.mxu0 %v413
    %433 = vmatpush.msra.mxu0 %v412
    %434 = vmatpush.msra.mxu0 %v411
    %435 = vmatpush.msra.mxu0 %v410
    %436 = vmatpush.msra.mxu0 %v409
    %437 = vmatpush.msra.mxu0 %v408
    %438 = vmatpush.msra.mxu0 %v407
    %439 = vmatmul.f32.gmra.mxu0 %v406
    %v440 = vpop.f32.mrf.mxu0
    %v441 = vadd.f32 0.0, %v440
    %442 = vdwg.mxu0
    %v443 = vsub.f32 0.0, %v441
    %v444 = vmul.f32 %v443, 1.442695
    %v445 = vpow.pop %v444
    %v446 = vadd.f32 %v445, 1.0
    %v447 = vrcp.pop %v446
    %v448 = vld [vmem:[%s10] sm:$0xf]
    %vm449 = vcmask 31744
    %v451 = vsel %vm449, %v447, 0
    %vm453 = vcmask 1043456
    %v455 = vsel %vm453, %v448, 0
    %457 = vmatpush.msra.mxu0 0.0
    %458 = vmatpush.msra.mxu0 0.0
    %459 = vmatpush.msra.mxu0 0.0
    %460 = vmatpush.msra.mxu0 0.0
    %461 = vmatpush.msra.mxu0 0.0
    %462 = vmatpush.msra.mxu0 0.0
    %463 = vmatpush.msra.mxu0 0.0
    %464 = vmatpush.msra.mxu0 0.0
    %465 = vmatpush.msra.mxu0 0.0
    %466 = vmatpush.msra.mxu0 0.0
    %467 = vmatpush.msra.mxu0 0.0
    %468 = vmatpush.msra.mxu0 0.0
    %469 = vmatpush.msra.mxu0 0.0
    %470 = vmatpush.msra.mxu0 0.0
    %471 = vmatpush.msra.mxu0 0.0
    %472 = vmatpush.msra.mxu0 %v455
    %473 = vmatmul.f32.gmra.mxu0 %v451
    %v474 = vpop.f32.mrf.mxu0
    %v475 = vadd.f32 0.0, %v474
    %476 = vdwg.mxu0
    %v477 = vsub.f32 %v346, %v402
    %v478 = vmul.f32 %v475, %v477
    %v479 = vadd.f32 %v402, %v478
    %v480 = vpack.c.bf16 %v479, %v479
    %v481 = vld [vmem:[%s7] sm:$0xf]
    %v482 = vld [vmem:[%s7 + $0x4] sm:$0xf]
    %v483 = vld [vmem:[%s7 + $0x8] sm:$0xf]
    %v484 = vld [vmem:[%s7 + $0xc] sm:$0xf]
    %v485 = vld [vmem:[%s7 + $0x10] sm:$0xf]
    %v486 = vld [vmem:[%s7 + $0x14] sm:$0xf]
    %v487 = vld [vmem:[%s7 + $0x18] sm:$0xf]
    %v488 = vld [vmem:[%s7 + $0x1c] sm:$0xf]
    %v489 = vld [vmem:[%s7 + $0x20] sm:$0xf]
    %v490 = vld [vmem:[%s7 + $0x24] sm:$0xf]
    %v491 = vld [vmem:[%s7 + $0x28] sm:$0xf]
    %v492 = vld [vmem:[%s7 + $0x2c] sm:$0xf]
    %v493 = vld [vmem:[%s7 + $0x30] sm:$0xf]
    %v494 = vld [vmem:[%s7 + $0x34] sm:$0xf]
    %v495 = vld [vmem:[%s7 + $0x38] sm:$0xf]
    %v496 = vld [vmem:[%s7 + $0x3c] sm:$0xf]
    %v497 = vld [vmem:[%s8] sm:$0x1]
    %v499 = vperm.slane %v497, 0
    %v517 = vunpack.c.l.b16 %v481
    %v518 = vunpack.c.l.b16 %v482
    %v519 = vunpack.c.l.b16 %v483
    %v520 = vunpack.c.l.b16 %v484
    %v521 = vunpack.c.l.b16 %v485
    %v522 = vunpack.c.l.b16 %v486
    %v523 = vunpack.c.l.b16 %v487
    %v524 = vunpack.c.l.b16 %v488
    %v525 = vunpack.c.l.b16 %v489
    %v526 = vunpack.c.l.b16 %v490
    %v527 = vunpack.c.l.b16 %v491
    %v528 = vunpack.c.l.b16 %v492
    %v529 = vunpack.c.l.b16 %v493
    %v530 = vunpack.c.l.b16 %v494
    %v531 = vunpack.c.l.b16 %v495
    %v532 = vunpack.c.l.b16 %v496
    %v533 = vpack.c.b16 %v518, %v517
    %v534 = vpack.c.b16 %v520, %v519
    %v535 = vpack.c.b16 %v522, %v521
    %v536 = vpack.c.b16 %v524, %v523
    %v537 = vpack.c.b16 %v526, %v525
    %v538 = vpack.c.b16 %v528, %v527
    %v539 = vpack.c.b16 %v530, %v529
    %v540 = vpack.c.b16 %v532, %v531
    %549 = vmatpush.bf16.msra.mxu0 %v540
    %550 = vmatpush.bf16.msra.mxu0 %v539
    %551 = vmatpush.bf16.msra.mxu0 %v538
    %552 = vmatpush.bf16.msra.mxu0 %v537
    %553 = vmatpush.bf16.msra.mxu0 %v536
    %554 = vmatpush.bf16.msra.mxu0 %v535
    %555 = vmatpush.bf16.msra.mxu0 %v534
    %556 = vmatpush.bf16.msra.mxu0 %v533
    %557 = vmatmul.bf16.gmra.mxu0 %v480
    %v558 = vpop.f32.mrf.mxu0
    %v559 = vadd.f32 %v499, %v558
    %v560 = vpop.f32.mrf.mxu0
    %561 = vdwg.mxu0
    %vm562 = vcmask 9216
    %563 = vst.msk [vmem:[#allocation14] sm:$0x3] %vm562, %v559
    // Predicated region
    $region62: #{tpu_custom_call.1} parent=1 // pred_check
      _
    $region63: #{tpu_custom_call.1} parent=1 // pred_check_branch
      %565 = sbr.rel (0) target = $region65
    $region64: #{tpu_custom_call.1} parent=1 // pred_region
      %567 = vsyncadd [#allocation8], 0
      %s569 = sshll.u32 [#allocation14], 4
      %s570 = int_to_ptr.vmem [resolvable:$true] %s569
      %s571 = sshll.u32 %s11, 4
      %s572 = int_to_ptr.hbm [resolvable:$true] %s571
      %574 = dma.vmem_to_hbm [thread:$0]  %s570, 32, %s572, [#allocation8]
    $region65: #{tpu_custom_call.1} parent=1 // pred_fallthru
      _
    // Predicated region
    $region66: #{tpu_custom_call.1} parent=1 // pred_check
      _
    $region67: #{tpu_custom_call.1} parent=1 // pred_check_branch
      %576 = sbr.rel (0) target = $region69
    $region68: #{tpu_custom_call.1} parent=1 // pred_region
      %578 = dma.done [#allocation8], 32
    $region69: #{tpu_custom_call.1} parent=1 // pred_fallthru
      _
    %579 = vsyncpa [#allocation7], 1
    %580 = vsyncpa [#allocation10], 1
    %581 = vsyncpa [#allocation13], 1
    %582 = vsyncpa [#allocation8], 1
  %583 = vsyncmov [#allocation3]
  %s584 = vpop.sfrf %583
  %p585 = scmp.eq.s32.totalorder %s584, 0
  %p586 = pneg %p585
  %588 = shalt.err (%p586)
  %s589 = scalar_lea.sflag [#allocation3], 1
  %590 = vsyncmov %s589
  %s591 = vpop.sfrf %590
  %p592 = scmp.eq.s32.totalorder %s591, 0
  %p593 = pneg %p592
  %595 = shalt.err (%p593)

</llo_original>
